<compile_context>
chip_gen: v7x
topology: tpu7x:2x2x1
jax: 0.10.0
libtpu: 0.0.40
codegen_flags: <defaults>
</compile_context>

<pallas_src>
import numpy as np
import jax
import jax.numpy as jnp
from jax.experimental import pallas as pl
from jax.experimental.pallas import tpu as pltpu

START_TOKEN = 33          # the reference module hard-codes prediction[:, 33] = 1
NEG_INF = -1000000000.0   # masked_fill value used by the reference Attention


def _round_up(x, m):
    return ((x + m - 1) // m) * m


# ----------------------------------------------------------------------------
# Pallas kernel: one grid step == one batch block; full decode loop inside.
# ----------------------------------------------------------------------------
def decoder_kernel(
    # scalar prefetch (SMEM)
    tf_ref,     # (max_len,) int32 : 1 = teacher forcing, 0 = greedy feedback
    # inputs (all resident in VMEM for the whole batch block)
    temb_ref,   # (L_temb, NB, H) f32  teacher-forced char embeddings (L_temb==1 at eval)
    key_ref,    # (NB, T, K) f32
    val_ref,    # (NB, T, V) f32
    lens_ref,   # (NB, 1) int32        (already // 8)
    emb_ref,    # (Vp, H) bf16         embedding table, vocab lane-padded
    w1_ref,     # (2H+V, 4H) bf16      lstm1 fused [W_emb | W_ctx | W_hh]^T, gates [i|f|o|g]
    b1_ref,     # (1, 4H) f32
    w2_ref,     # (H+K, 4K) bf16       lstm2 fused [W_ih | W_hh]^T, gates [i|f|o|g]
    b2_ref,     # (1, 4K) f32
    wcp_ref,    # (K+V, Vp) bf16       character_prob, vocab lane-padded
    bcp_ref,    # (1, Vp) f32          padded lanes hold NEG_INF
    # output
    pred_out,   # (max_len, NB, Vp) f32  resident logits slab, written once per step
    # scratch
    ce_ref,     # (NB, H) f32          selected char embedding for the current step
):
    NB, T, K = key_ref.shape
    V = val_ref.shape[2]
    H = temb_ref.shape[2]
    Vp = pred_out.shape[2]
    max_len = pred_out.shape[0]
    L_temb = temb_ref.shape[0]

    # Hoisted broadcasts (computed once per batch block, not per step).
    lane_v = jax.lax.broadcasted_iota(jnp.int32, (NB, Vp), 1)   # vocab lane ids
    pos_t = jax.lax.broadcasted_iota(jnp.int32, (NB, T), 1)     # encoder positions
    lens_b = lens_ref[...]                                       # (NB, 1) int32

    def step(t, carry):
        h1, c1, h2, c2, ctx, prev_pred = carry
        tf_flag = tf_ref[t]

        # ---- input char embedding: teacher forcing OR greedy feedback (gated) ----
        @pl.when(tf_flag == 1)
        def _teacher():
            ce_ref[...] = temb_ref[jnp.minimum(t, L_temb - 1)]

        @pl.when(tf_flag == 0)
        def _greedy():
            mx = jnp.max(prev_pred, axis=1, keepdims=True)
            amax = jnp.min(jnp.where(prev_pred == mx, lane_v, Vp),
                           axis=1, keepdims=True)                # first argmax
            onehot = (lane_v == amax).astype(jnp.bfloat16)       # (NB, Vp)
            ce_ref[...] = jnp.dot(onehot, emb_ref[...],
                                  preferred_element_type=jnp.float32)

        char_embed = ce_ref[...]                                 # (NB, H) f32

        # ---- LSTMCell 1 : one fused bf16 matmul over [char_embed | ctx | h1] ----
        x1 = jnp.concatenate([char_embed, ctx, h1], axis=1).astype(jnp.bfloat16)
        gates1 = jnp.dot(x1, w1_ref[...],
                         preferred_element_type=jnp.float32) + b1_ref[...]
        s1 = jax.nn.sigmoid(gates1[:, :3 * H])                   # [i|f|o] in one pass
        g1 = jnp.tanh(gates1[:, 3 * H:])                         # g
        c1n = s1[:, H:2 * H] * c1 + s1[:, :H] * g1
        h1n = s1[:, 2 * H:3 * H] * jnp.tanh(c1n)

        # ---- LSTMCell 2 : one fused bf16 matmul over [h1n | h2] ----
        x2 = jnp.concatenate([h1n, h2], axis=1).astype(jnp.bfloat16)
        gates2 = jnp.dot(x2, w2_ref[...],
                         preferred_element_type=jnp.float32) + b2_ref[...]
        s2 = jax.nn.sigmoid(gates2[:, :3 * K])
        g2 = jnp.tanh(gates2[:, 3 * K:])
        c2n = s2[:, K:2 * K] * c2 + s2[:, :K] * g2
        h2n = s2[:, 2 * K:3 * K] * jnp.tanh(c2n)                 # query (NB, K)

        # ---- Attention: VPU broadcast-multiply + reduce (no q=1 MXU matmuls) ----
        energy = jnp.sum(key_ref[...] * h2n[:, None, :], axis=2)    # (NB, T)
        energy = jnp.where(pos_t >= lens_b, NEG_INF, energy)
        emax = jnp.max(energy, axis=1, keepdims=True)
        p = jnp.exp(energy - emax)
        attn = p / jnp.sum(p, axis=1, keepdims=True)                 # exact softmax
        ctxn = jnp.sum(attn[:, :, None] * val_ref[...], axis=1)      # (NB, V)

        # ---- character_prob over [output | context] (lane-padded vocab) ----
        xo = jnp.concatenate([h2n, ctxn], axis=1).astype(jnp.bfloat16)
        pred = jnp.dot(xo, wcp_ref[...],
                       preferred_element_type=jnp.float32) + bcp_ref[...]

        pred_out[t] = pred                                           # lane-dense store
        return (h1n, c1n, h2n, c2n, ctxn, pred)

    init = (
        jnp.zeros((NB, H), jnp.float32),                 # h1
        jnp.zeros((NB, H), jnp.float32),                 # c1
        jnp.zeros((NB, K), jnp.float32),                 # h2
        jnp.zeros((NB, K), jnp.float32),                 # c2
        jnp.zeros((NB, V), jnp.float32),                 # context
        (lane_v == START_TOKEN).astype(jnp.float32),     # prediction[:, 33] = 1
    )
    jax.lax.fori_loop(0, max_len, step, init)


# ----------------------------------------------------------------------------
# pallas_call builder
# ----------------------------------------------------------------------------
def make_decoder_call(NB, n_bblocks, max_len, L_temb, T, H, V, K, Vp):
    c2d = lambda b, tf: (0, 0)   # resident operands: constant block index -> DMA once

    in_specs = [
        pl.BlockSpec((L_temb, NB, H), lambda b, tf: (0, b, 0)),   # teacher embeddings
        pl.BlockSpec((NB, T, K), lambda b, tf: (b, 0, 0)),        # key
        pl.BlockSpec((NB, T, V), lambda b, tf: (b, 0, 0)),        # values
        pl.BlockSpec((NB, 1), lambda b, tf: (b, 0)),              # lens // 8
        pl.BlockSpec((Vp, H), c2d),                               # embedding table
        pl.BlockSpec((2 * H + V, 4 * H), c2d),                    # w1
        pl.BlockSpec((1, 4 * H), c2d),                            # b1
        pl.BlockSpec((H + K, 4 * K), c2d),                        # w2
        pl.BlockSpec((1, 4 * K), c2d),                            # b2
        pl.BlockSpec((K + V, Vp), c2d),                           # wcp
        pl.BlockSpec((1, Vp), c2d),                               # bcp
    ]
    out_spec = pl.BlockSpec((max_len, NB, Vp), lambda b, tf: (0, b, 0))
    scratch = [pltpu.VMEM((NB, H), jnp.float32)]                  # selected char embedding

    grid_spec = pltpu.PrefetchScalarGridSpec(
        num_scalar_prefetch=1,
        grid=(n_bblocks,),
        in_specs=in_specs,
        out_specs=out_spec,
        scratch_shapes=scratch,
    )

    # Rough per-block resident VMEM (bytes): f32 operands + bf16 weights.
    resident = (
        4 * (L_temb * NB * H + NB * T * K + NB * T * V + NB
             + 4 * H + 4 * K + Vp + max_len * NB * Vp + NB * H)
        + 2 * (Vp * H + (2 * H + V) * 4 * H + (H + K) * 4 * K + (K + V) * Vp)
    )
    vmem_bytes = int(min(100 * 1024 * 1024,
                         max(32 * 1024 * 1024, 3 * resident + (4 << 20))))

    # Advisory cost estimate for the (long, serial) decode custom call.
    NP = n_bblocks * NB
    flops = int(max_len * NP * 2 * (
        (2 * H + V) * 4 * H + (H + K) * 4 * K + (K + V) * Vp + Vp * H + T * (K + V)))
    transcend = int(max_len * NP * (4 * H + 4 * K + T))
    bytes_acc = int(
        4 * (max_len + L_temb * NP * H + NP * T * K + NP * T * V + NP
             + 4 * H + 4 * K + Vp + max_len * NP * Vp)
        + 2 * (Vp * H + (2 * H + V) * 4 * H + (H + K) * 4 * K + (K + V) * Vp))

    return pl.pallas_call(
        decoder_kernel,
        out_shape=jax.ShapeDtypeStruct((max_len, n_bblocks * NB, Vp), jnp.float32),
        grid_spec=grid_spec,
        compiler_params=pltpu.CompilerParams(
            dimension_semantics=("parallel",),
            vmem_limit_bytes=vmem_bytes),
        cost_estimate=pl.CostEstimate(
            flops=flops, transcendentals=transcend, bytes_accessed=bytes_acc),
    )


# ----------------------------------------------------------------------------
# Parameter init (mirrors nn.Module __init__ shapes, pre-fused for the kernel)
# ----------------------------------------------------------------------------
def _ifgo_to_ifog(w, h):
    # columns are [i|f|g|o] blocks of width h -> reorder to [i|f|o|g]
    return jnp.concatenate([w[:, :2 * h], w[:, 3 * h:], w[:, 2 * h:3 * h]], axis=1)


def init_params(rng, vocab_size, hidden_dim, value_size, key_size):
    assert vocab_size > START_TOKEN, "reference module hard-codes start token 33"
    ks = jax.random.split(rng, 11)
    s = 0.1
    H, V, K = hidden_dim, value_size, key_size
    Vp = _round_up(vocab_size, 128)

    emb = jax.random.normal(ks[0], (vocab_size, H), jnp.float32) * s
    emb = emb.at[0].set(0.0)  # padding_idx=0

    # nn.LSTMCell weights: (4*hidden, input) / (4*hidden, hidden), gate order i,f,g,o
    w_ih1 = jax.random.normal(ks[1], (4 * H, H + V), jnp.float32) * s
    w_hh1 = jax.random.normal(ks[2], (4 * H, H), jnp.float32) * s
    b_ih1 = jax.random.normal(ks[3], (4 * H,), jnp.float32) * s
    b_hh1 = jax.random.normal(ks[4], (4 * H,), jnp.float32) * s

    w_ih2 = jax.random.normal(ks[5], (4 * K, H), jnp.float32) * s
    w_hh2 = jax.random.normal(ks[6], (4 * K, K), jnp.float32) * s
    b_ih2 = jax.random.normal(ks[7], (4 * K,), jnp.float32) * s
    b_hh2 = jax.random.normal(ks[8], (4 * K,), jnp.float32) * s

    w_cp = jax.random.normal(ks[9], (vocab_size, K + V), jnp.float32) * s
    b_cp = jax.random.normal(ks[10], (vocab_size,), jnp.float32) * s

    # Fuse + transpose for the kernel; reorder gates i,f,g,o -> i,f,o,g (layout glue only).
    w1 = jnp.concatenate([jnp.transpose(w_ih1[:, :H]),      # rows for char_embed
                          jnp.transpose(w_ih1[:, H:]),      # rows for context
                          jnp.transpose(w_hh1)], axis=0)    # rows for h1
    w1 = _ifgo_to_ifog(w1, H)
    b1 = _ifgo_to_ifog((b_ih1 + b_hh1).reshape(1, 4 * H), H)

    w2 = jnp.concatenate([jnp.transpose(w_ih2),
                          jnp.transpose(w_hh2)], axis=0)
    w2 = _ifgo_to_ifog(w2, K)
    b2 = _ifgo_to_ifog((b_ih2 + b_hh2).reshape(1, 4 * K), K)

    wcp = jnp.concatenate([jnp.transpose(w_cp[:, :K]),      # rows for output (h2)
                           jnp.transpose(w_cp[:, K:])], axis=0)
    wcp = jnp.pad(wcp, ((0, 0), (0, Vp - vocab_size)))      # zero-pad vocab lanes
    bcp = jnp.full((1, Vp), NEG_INF, jnp.float32).at[0, :vocab_size].set(b_cp)
    emb_pad = jnp.pad(emb, ((0, Vp - vocab_size), (0, 0)))

    return dict(
        embedding=emb,                                      # f32, host teacher gather
        emb_pad=emb_pad.astype(jnp.bfloat16),
        w1=w1.astype(jnp.bfloat16), b1=b1,
        w2=w2.astype(jnp.bfloat16), b2=b2,
        wcp=wcp.astype(jnp.bfloat16), bcp=bcp,
        vocab=vocab_size, Vp=Vp, H=H, V=V, K=K,
    )


# ----------------------------------------------------------------------------
# Decoder forward (host side only does padding / gather glue + TF schedule)
# ----------------------------------------------------------------------------
def decoder_forward(params, key_enc, values, text, lens, teach, is_train=True):
    N, T, K = key_enc.shape
    V = values.shape[2]
    H, vocab, Vp = params["H"], params["vocab"], params["Vp"]

    if is_train:
        max_len = text.shape[1] - 1
        # teacher-forcing schedule (host-side, mirrors np.random.permutation in torch code)
        idx = np.random.permutation(max_len)[: int(max_len * teach)]
        tf_mask = np.ones((max_len,), np.int32)
        tf_mask[idx] = 0                                    # these steps use greedy feedback
        temb = params["embedding"][jnp.asarray(text, jnp.int32)][:, :max_len, :]
        temb = jnp.transpose(temb, (1, 0, 2))               # (max_len, N, H)
    else:
        max_len = 250
        tf_mask = np.zeros((max_len,), np.int32)
        temb = jnp.zeros((1, N, H), jnp.float32)            # never read; single tiny DMA

    # Sublane-pad the batch to a multiple of 8; padded rows are inert.
    N_pad = _round_up(N, 8)
    pad = N_pad - N
    lens8 = (jnp.asarray(lens, jnp.int32) // 8).reshape(N, 1)
    key_p = jnp.pad(key_enc, ((0, pad), (0, 0), (0, 0))) if pad else key_enc
    val_p = jnp.pad(values, ((0, pad), (0, 0), (0, 0))) if pad else values
    temb_p = jnp.pad(temb, ((0, 0), (0, pad), (0, 0))) if pad else temb
    lens_p = (jnp.concatenate([lens8, jnp.full((pad, 1), T, jnp.int32)], axis=0)
              if pad else lens8)

    # Batch-block choice: >=2 blocks when the padded batch allows it so the
    # "parallel" grid axis shards across both TensorCores on v7x; on single-TC
    # v5e/v6e the axis is just a serial loop, so one big block is equally fine.
    n_bblocks = 2 if (N_pad % 16 == 0) else 1
    NB = N_pad // n_bblocks

    call = make_decoder_call(NB, n_bblocks, max_len, temb_p.shape[0], T, H, V, K, Vp)
    preds = call(
        jnp.asarray(tf_mask, jnp.int32),
        temb_p, key_p, val_p, lens_p,
        params["emb_pad"], params["w1"], params["b1"],
        params["w2"], params["b2"], params["wcp"], params["bcp"],
    )
    # (max_len, N_pad, Vp) -> (N, max_len, vocab)
    return jnp.transpose(preds, (1, 0, 2))[:N, :, :vocab]


# ----------------------------------------------------------------------------
if __name__ == "__main__":
    np.random.seed(0)
    rng = jax.random.PRNGKey(0)

    # Small, forward-consistent shapes.
    N = 2            # batch
    T = 8            # encoder time steps
    key_size = 16
    value_size = 16
    hidden_dim = 32
    vocab_size = 35  # matches the hard-coded (N, 35) / index-33 start token
    text_len = 6     # -> max_len = 5 decode steps
    teach = 0.5

    r1, r2, r3, r4 = jax.random.split(rng, 4)
    key_enc = jax.random.normal(r1, (N, T, key_size), jnp.float32)
    values = jax.random.normal(r2, (N, T, value_size), jnp.float32)
    text = jax.random.randint(r3, (N, text_len), 1, vocab_size, jnp.int32)
    lens = jnp.array([T * 8, 5 * 8], jnp.int32)   # pre-downsample lengths (// 8 in forward)

    params = init_params(r4, vocab_size, hidden_dim, value_size, key_size)

    out = decoder_forward(params, key_enc, values, text, lens, teach, is_train=True)
    out = jax.block_until_ready(out)

    assert out.shape == (N, text_len - 1, vocab_size), out.shape
    assert bool(jnp.all(jnp.isfinite(out)))
    print("KERNEL_OK")
</pallas_src>

<mosaic_0001>
module attributes {stable_mosaic.version = 11 : i64} {
  func.func @decoder_kernel(%arg0: i32, %arg1: memref<5xi32, #tpu.memory_space<smem>>, %arg2: memref<5x8x32xf32, #tpu.memory_space<vmem>>, %arg3: memref<8x8x16xf32, #tpu.memory_space<vmem>>, %arg4: memref<8x8x16xf32, #tpu.memory_space<vmem>>, %arg5: memref<8x1xi32, #tpu.memory_space<vmem>>, %arg6: memref<128x32xbf16, #tpu.memory_space<vmem>>, %arg7: memref<80x128xbf16, #tpu.memory_space<vmem>>, %arg8: memref<1x128xf32, #tpu.memory_space<vmem>>, %arg9: memref<48x64xbf16, #tpu.memory_space<vmem>>, %arg10: memref<1x64xf32, #tpu.memory_space<vmem>>, %arg11: memref<32x128xbf16, #tpu.memory_space<vmem>>, %arg12: memref<1x128xf32, #tpu.memory_space<vmem>>, %arg13: memref<5x8x128xf32, #tpu.memory_space<vmem>>, %arg14: memref<8x32xf32, #tpu.memory_space<vmem>>) attributes {dimension_semantics = [#tpu.dimension_semantics<parallel>], iteration_bounds = array<i64: 1>, scalar_prefetch = 1 : i64, scratch_operands = 1 : i64, tpu.core_type = #tpu.core_type<tc>, window_params = [{transform_indices = @transform_0, window_bounds = array<i64: 5, 8, 32>}, {transform_indices = @transform_1, window_bounds = array<i64: 8, 8, 16>}, {transform_indices = @transform_2, window_bounds = array<i64: 8, 8, 16>}, {transform_indices = @transform_3, window_bounds = array<i64: 8, 1>}, {pipeline_mode = #tpu.pipeline_mode<synchronous>, transform_indices = @transform_4, window_bounds = array<i64: 128, 32>}, {pipeline_mode = #tpu.pipeline_mode<synchronous>, transform_indices = @transform_5, window_bounds = array<i64: 80, 128>}, {pipeline_mode = #tpu.pipeline_mode<synchronous>, transform_indices = @transform_6, window_bounds = array<i64: 1, 128>}, {pipeline_mode = #tpu.pipeline_mode<synchronous>, transform_indices = @transform_7, window_bounds = array<i64: 48, 64>}, {pipeline_mode = #tpu.pipeline_mode<synchronous>, transform_indices = @transform_8, window_bounds = array<i64: 1, 64>}, {pipeline_mode = #tpu.pipeline_mode<synchronous>, transform_indices = @transform_9, window_bounds = array<i64: 32, 128>}, {pipeline_mode = #tpu.pipeline_mode<synchronous>, transform_indices = @transform_10, window_bounds = array<i64: 1, 128>}, {transform_indices = @transform_11, window_bounds = array<i64: 5, 8, 128>}]} {
    %0 = tpu.iota {dimensions = array<i32: 1>} : vector<8x128xi32>
    %1 = tpu.iota {dimensions = array<i32: 1>} : vector<8x8xi32>
    %c0 = arith.constant 0 : index
    %c0_0 = arith.constant 0 : index
    %2 = vector.load %arg5[%c0, %c0_0] : memref<8x1xi32, #tpu.memory_space<vmem>>, vector<8x1xi32>
    %cst = arith.constant 0.000000e+00 : f32
    %3 = vector.broadcast %cst : f32 to vector<8x32xf32>
    %cst_1 = arith.constant 0.000000e+00 : f32
    %4 = vector.broadcast %cst_1 : f32 to vector<8x32xf32>
    %cst_2 = arith.constant 0.000000e+00 : f32
    %5 = vector.broadcast %cst_2 : f32 to vector<8x16xf32>
    %cst_3 = arith.constant 0.000000e+00 : f32
    %6 = vector.broadcast %cst_3 : f32 to vector<8x16xf32>
    %cst_4 = arith.constant 0.000000e+00 : f32
    %7 = vector.broadcast %cst_4 : f32 to vector<8x16xf32>
    %c33_i32 = arith.constant 33 : i32
    %8 = vector.broadcast %c33_i32 : i32 to vector<8x128xi32>
    %9 = arith.cmpi eq, %0, %8 : vector<8x128xi32>
    %10 = arith.extui %9 : vector<8x128xi1> to vector<8x128xi32>
    %11 = arith.sitofp %10 : vector<8x128xi32> to vector<8x128xf32>
    %c0_i32 = arith.constant 0 : i32
    %c5_i32 = arith.constant 5 : i32
    %12 = arith.addi %c0_i32, %c5_i32 : i32
    %c1_i32 = arith.constant 1 : i32
    %13:6 = scf.for %arg15 = %c0_i32 to %12 step %c1_i32 iter_args(%arg16 = %3, %arg17 = %4, %arg18 = %5, %arg19 = %6, %arg20 = %7, %arg21 = %11) -> (vector<8x32xf32>, vector<8x32xf32>, vector<8x16xf32>, vector<8x16xf32>, vector<8x16xf32>, vector<8x128xf32>)  : i32 {
      %14 = arith.index_cast %arg15 : i32 to index
      %15 = memref.load %arg1[%14] : memref<5xi32, #tpu.memory_space<smem>>
      %c1_i32_6 = arith.constant 1 : i32
      %16 = arith.cmpi eq, %15, %c1_i32_6 : i32
      %17 = arith.extui %16 : i1 to i32
      %c0_i32_7 = arith.constant 0 : i32
      %18 = arith.cmpi ne, %17, %c0_i32_7 : i32
      scf.if %18 {
        %c4_i32 = arith.constant 4 : i32
        %103 = arith.minsi %arg15, %c4_i32 : i32
        %104 = arith.index_cast %103 : i32 to index
        %c0_42 = arith.constant 0 : index
        %c0_43 = arith.constant 0 : index
        %105 = vector.load %arg2[%104, %c0_42, %c0_43] : memref<5x8x32xf32, #tpu.memory_space<vmem>>, vector<1x8x32xf32>
        %106 = vector.shape_cast %105 : vector<1x8x32xf32> to vector<8x32xf32>
        %c0_44 = arith.constant 0 : index
        %c0_45 = arith.constant 0 : index
        %107 = vector.load %arg14[%c0_44, %c0_45] : memref<8x32xf32, #tpu.memory_space<vmem>>, vector<8x32xf32>
        tpu.vector_store %arg14[%c0_44, %c0_45], %106 {strides = array<i32>} : memref<8x32xf32, #tpu.memory_space<vmem>>, vector<8x32xf32>,
      } else {
      }
      %c0_i32_8 = arith.constant 0 : i32
      %19 = arith.cmpi eq, %15, %c0_i32_8 : i32
      %20 = arith.extui %19 : i1 to i32
      %c0_i32_9 = arith.constant 0 : i32
      %21 = arith.cmpi ne, %20, %c0_i32_9 : i32
      scf.if %21 {
        %cst_42 = arith.constant dense<0xFF800000> : vector<8xf32>
        %103 = vector.multi_reduction <maximumf>, %arg21, %cst_42 [1] : vector<8x128xf32> to vector<8xf32>
        %104 = vector.shape_cast %103 : vector<8xf32> to vector<8x1xf32>
        %105 = vector.broadcast %104 : vector<8x1xf32> to vector<8x128xf32>
        %106 = arith.cmpf oeq, %arg21, %105 : vector<8x128xf32>
        %c128_i32 = arith.constant 128 : i32
        %107 = vector.broadcast %c128_i32 : i32 to vector<8x128xi32>
        %108 = arith.select %106, %0, %107 : vector<8x128xi1>, vector<8x128xi32>
        %cst_43 = arith.constant dense<2147483647> : vector<8xi32>
        %109 = vector.multi_reduction <minsi>, %108, %cst_43 [1] : vector<8x128xi32> to vector<8xi32>
        %110 = vector.shape_cast %109 : vector<8xi32> to vector<8x1xi32>
        %111 = vector.broadcast %110 : vector<8x1xi32> to vector<8x128xi32>
        %112 = arith.cmpi eq, %0, %111 : vector<8x128xi32>
        %113 = arith.extui %112 : vector<8x128xi1> to vector<8x128xi32>
        %114 = arith.sitofp %113 : vector<8x128xi32> to vector<8x128xf32>
        %115 = arith.truncf %114 : vector<8x128xf32> to vector<8x128xbf16>
        %c0_44 = arith.constant 0 : index
        %c0_45 = arith.constant 0 : index
        %116 = vector.load %arg6[%c0_44, %c0_45] : memref<128x32xbf16, #tpu.memory_space<vmem>>, vector<128x32xbf16>
        %cst_46 = arith.constant dense<0.000000e+00> : vector<8x32xf32>
        %117 = tpu.matmul %115, %116, %cst_46 {dimension_numbers = #tpu.dot_dimension_numbers<[1], [0], [0], [1], [0, 0, 1, 1], [], []>} : vector<8x128xbf16>, vector<128x32xbf16>, vector<8x32xf32> -> vector<8x32xf32>
        %c0_47 = arith.constant 0 : index
        %c0_48 = arith.constant 0 : index
        %118 = vector.load %arg14[%c0_47, %c0_48] : memref<8x32xf32, #tpu.memory_space<vmem>>, vector<8x32xf32>
        tpu.vector_store %arg14[%c0_47, %c0_48], %117 {strides = array<i32>} : memref<8x32xf32, #tpu.memory_space<vmem>>, vector<8x32xf32>,
      } else {
      }
      %c0_10 = arith.constant 0 : index
      %c0_11 = arith.constant 0 : index
      %22 = vector.load %arg14[%c0_10, %c0_11] : memref<8x32xf32, #tpu.memory_space<vmem>>, vector<8x32xf32>
      %23 = tpu.concatenate %22, %arg20, %arg16 in 1 : vector<8x32xf32>, vector<8x16xf32>, vector<8x32xf32> -> vector<8x80xf32>
      %24 = arith.truncf %23 : vector<8x80xf32> to vector<8x80xbf16>
      %c0_12 = arith.constant 0 : index
      %c0_13 = arith.constant 0 : index
      %25 = vector.load %arg7[%c0_12, %c0_13] : memref<80x128xbf16, #tpu.memory_space<vmem>>, vector<80x128xbf16>
      %cst_14 = arith.constant dense<0.000000e+00> : vector<8x128xf32>
      %26 = tpu.matmul %24, %25, %cst_14 {dimension_numbers = #tpu.dot_dimension_numbers<[1], [0], [0], [1], [0, 0, 1, 1], [], []>} : vector<8x80xbf16>, vector<80x128xbf16>, vector<8x128xf32> -> vector<8x128xf32>
      %c0_15 = arith.constant 0 : index
      %c0_16 = arith.constant 0 : index
      %27 = vector.load %arg8[%c0_15, %c0_16] : memref<1x128xf32, #tpu.memory_space<vmem>>, vector<1x128xf32>
      %28 = vector.broadcast %27 : vector<1x128xf32> to vector<8x128xf32>
      %29 = arith.addf %26, %28 : vector<8x128xf32>
      %30 = vector.extract_strided_slice %29 {offsets = [0, 0], sizes = [8, 96], strides = [1, 1]} : vector<8x128xf32> to vector<8x96xf32>
      %31 = arith.negf %30 : vector<8x96xf32>
      %32 = math.exp %31 : vector<8x96xf32>
      %cst_17 = arith.constant 1.000000e+00 : f32
      %33 = vector.broadcast %cst_17 : f32 to vector<8x96xf32>
      %34 = arith.addf %33, %32 : vector<8x96xf32>
      %35 = arith.divf %33, %34 : vector<8x96xf32>
      %36 = vector.extract_strided_slice %29 {offsets = [0, 96], sizes = [8, 32], strides = [1, 1]} : vector<8x128xf32> to vector<8x32xf32>
      %37 = math.tanh %36 : vector<8x32xf32>
      %38 = vector.extract_strided_slice %35 {offsets = [0, 32], sizes = [8, 32], strides = [1, 1]} : vector<8x96xf32> to vector<8x32xf32>
      %39 = arith.mulf %38, %arg17 : vector<8x32xf32>
      %40 = vector.extract_strided_slice %35 {offsets = [0, 0], sizes = [8, 32], strides = [1, 1]} : vector<8x96xf32> to vector<8x32xf32>
      %41 = arith.mulf %40, %37 : vector<8x32xf32>
      %42 = arith.addf %39, %41 : vector<8x32xf32>
      %43 = vector.extract_strided_slice %35 {offsets = [0, 64], sizes = [8, 32], strides = [1, 1]} : vector<8x96xf32> to vector<8x32xf32>
      %44 = math.tanh %42 : vector<8x32xf32>
      %45 = arith.mulf %43, %44 : vector<8x32xf32>
      %46 = tpu.concatenate %45, %arg18 in 1 : vector<8x32xf32>, vector<8x16xf32> -> vector<8x48xf32>
      %47 = arith.truncf %46 : vector<8x48xf32> to vector<8x48xbf16>
      %c0_18 = arith.constant 0 : index
      %c0_19 = arith.constant 0 : index
      %48 = vector.load %arg9[%c0_18, %c0_19] : memref<48x64xbf16, #tpu.memory_space<vmem>>, vector<48x64xbf16>
      %cst_20 = arith.constant dense<0.000000e+00> : vector<8x64xf32>
      %49 = tpu.matmul %47, %48, %cst_20 {dimension_numbers = #tpu.dot_dimension_numbers<[1], [0], [0], [1], [0, 0, 1, 1], [], []>} : vector<8x48xbf16>, vector<48x64xbf16>, vector<8x64xf32> -> vector<8x64xf32>
      %c0_21 = arith.constant 0 : index
      %c0_22 = arith.constant 0 : index
      %50 = vector.load %arg10[%c0_21, %c0_22] : memref<1x64xf32, #tpu.memory_space<vmem>>, vector<1x64xf32>
      %51 = vector.broadcast %50 : vector<1x64xf32> to vector<8x64xf32>
      %52 = arith.addf %49, %51 : vector<8x64xf32>
      %53 = vector.extract_strided_slice %52 {offsets = [0, 0], sizes = [8, 48], strides = [1, 1]} : vector<8x64xf32> to vector<8x48xf32>
      %54 = arith.negf %53 : vector<8x48xf32>
      %55 = math.exp %54 : vector<8x48xf32>
      %cst_23 = arith.constant 1.000000e+00 : f32
      %56 = vector.broadcast %cst_23 : f32 to vector<8x48xf32>
      %57 = arith.addf %56, %55 : vector<8x48xf32>
      %58 = arith.divf %56, %57 : vector<8x48xf32>
      %59 = vector.extract_strided_slice %52 {offsets = [0, 48], sizes = [8, 16], strides = [1, 1]} : vector<8x64xf32> to vector<8x16xf32>
      %60 = math.tanh %59 : vector<8x16xf32>
      %61 = vector.extract_strided_slice %58 {offsets = [0, 16], sizes = [8, 16], strides = [1, 1]} : vector<8x48xf32> to vector<8x16xf32>
      %62 = arith.mulf %61, %arg19 : vector<8x16xf32>
      %63 = vector.extract_strided_slice %58 {offsets = [0, 0], sizes = [8, 16], strides = [1, 1]} : vector<8x48xf32> to vector<8x16xf32>
      %64 = arith.mulf %63, %60 : vector<8x16xf32>
      %65 = arith.addf %62, %64 : vector<8x16xf32>
      %66 = vector.extract_strided_slice %58 {offsets = [0, 32], sizes = [8, 16], strides = [1, 1]} : vector<8x48xf32> to vector<8x16xf32>
      %67 = math.tanh %65 : vector<8x16xf32>
      %68 = arith.mulf %66, %67 : vector<8x16xf32>
      %c0_24 = arith.constant 0 : index
      %c0_25 = arith.constant 0 : index
      %c0_26 = arith.constant 0 : index
      %69 = vector.load %arg3[%c0_24, %c0_25, %c0_26] : memref<8x8x16xf32, #tpu.memory_space<vmem>>, vector<8x8x16xf32>
      %70 = vector.shape_cast %68 : vector<8x16xf32> to vector<8x1x16xf32>
      %71 = vector.broadcast %70 : vector<8x1x16xf32> to vector<8x8x16xf32>
      %72 = arith.mulf %69, %71 : vector<8x8x16xf32>
      %cst_27 = arith.constant dense<0.000000e+00> : vector<8x8xf32>
      %73 = vector.multi_reduction <add>, %72, %cst_27 [2] : vector<8x8x16xf32> to vector<8x8xf32>
      %74 = vector.broadcast %2 : vector<8x1xi32> to vector<8x8xi32>
      %75 = arith.cmpi sge, %1, %74 : vector<8x8xi32>
      %cst_28 = arith.constant -1.000000e+09 : f32
      %76 = vector.broadcast %cst_28 : f32 to vector<8x8xf32>
      %77 = arith.select %75, %76, %73 : vector<8x8xi1>, vector<8x8xf32>
      %cst_29 = arith.constant dense<0xFF800000> : vector<8xf32>
      %78 = vector.multi_reduction <maximumf>, %77, %cst_29 [1] : vector<8x8xf32> to vector<8xf32>
      %79 = vector.shape_cast %78 : vector<8xf32> to vector<8x1xf32>
      %80 = vector.broadcast %79 : vector<8x1xf32> to vector<8x8xf32>
      %81 = arith.subf %77, %80 : vector<8x8xf32>
      %82 = math.exp %81 : vector<8x8xf32>
      %cst_30 = arith.constant dense<0.000000e+00> : vector<8xf32>
      %83 = vector.multi_reduction <add>, %82, %cst_30 [1] : vector<8x8xf32> to vector<8xf32>
      %84 = vector.shape_cast %83 : vector<8xf32> to vector<8x1xf32>
      %85 = vector.broadcast %84 : vector<8x1xf32> to vector<8x8xf32>
      %86 = arith.divf %82, %85 : vector<8x8xf32>
      %87 = vector.shape_cast %86 : vector<8x8xf32> to vector<8x8x1xf32>
      %c0_31 = arith.constant 0 : index
      %c0_32 = arith.constant 0 : index
      %c0_33 = arith.constant 0 : index
      %88 = vector.load %arg4[%c0_31, %c0_32, %c0_33] : memref<8x8x16xf32, #tpu.memory_space<vmem>>, vector<8x8x16xf32>
      %89 = vector.broadcast %87 : vector<8x8x1xf32> to vector<8x8x16xf32>
      %90 = arith.mulf %89, %88 : vector<8x8x16xf32>
      %cst_34 = arith.constant dense<0.000000e+00> : vector<8x16xf32>
      %91 = vector.multi_reduction <add>, %90, %cst_34 [1] : vector<8x8x16xf32> to vector<8x16xf32>
      %92 = tpu.concatenate %68, %91 in 1 : vector<8x16xf32>, vector<8x16xf32> -> vector<8x32xf32>
      %93 = arith.truncf %92 : vector<8x32xf32> to vector<8x32xbf16>
      %c0_35 = arith.constant 0 : index
      %c0_36 = arith.constant 0 : index
      %94 = vector.load %arg11[%c0_35, %c0_36] : memref<32x128xbf16, #tpu.memory_space<vmem>>, vector<32x128xbf16>
      %cst_37 = arith.constant dense<0.000000e+00> : vector<8x128xf32>
      %95 = tpu.matmul %93, %94, %cst_37 {dimension_numbers = #tpu.dot_dimension_numbers<[1], [0], [0], [1], [0, 0, 1, 1], [], []>} : vector<8x32xbf16>, vector<32x128xbf16>, vector<8x128xf32> -> vector<8x128xf32>
      %c0_38 = arith.constant 0 : index
      %c0_39 = arith.constant 0 : index
      %96 = vector.load %arg12[%c0_38, %c0_39] : memref<1x128xf32, #tpu.memory_space<vmem>>, vector<1x128xf32>
      %97 = vector.broadcast %96 : vector<1x128xf32> to vector<8x128xf32>
      %98 = arith.addf %95, %97 : vector<8x128xf32>
      %99 = arith.index_cast %arg15 : i32 to index
      %c0_40 = arith.constant 0 : index
      %c0_41 = arith.constant 0 : index
      %100 = vector.load %arg13[%99, %c0_40, %c0_41] : memref<5x8x128xf32, #tpu.memory_space<vmem>>, vector<1x8x128xf32>
      %101 = vector.shape_cast %100 : vector<1x8x128xf32> to vector<8x128xf32>
      %102 = vector.shape_cast %98 : vector<8x128xf32> to vector<1x8x128xf32>
      tpu.vector_store %arg13[%99, %c0_40, %c0_41], %102 {strides = array<i32>} : memref<5x8x128xf32, #tpu.memory_space<vmem>>, vector<1x8x128xf32>,
      scf.yield %45, %42, %68, %65, %91, %98 : vector<8x32xf32>, vector<8x32xf32>, vector<8x16xf32>, vector<8x16xf32>, vector<8x16xf32>, vector<8x128xf32>
    }
    %c5_i32_5 = arith.constant 5 : i32
    return
  }
  func.func @transform_0(%arg0: i32, %arg1: memref<5xi32, #tpu.memory_space<smem>>) -> (i32, i32, i32) {
    %c0_i32 = arith.constant 0 : i32
    %c0_i32_0 = arith.constant 0 : i32
    %c0_i32_1 = arith.constant 0 : i32
    return %c0_i32, %arg0, %c0_i32_0 : i32, i32, i32
  }
  func.func @transform_1(%arg0: i32, %arg1: memref<5xi32, #tpu.memory_space<smem>>) -> (i32, i32, i32) {
    %c0_i32 = arith.constant 0 : i32
    %c0_i32_0 = arith.constant 0 : i32
    %c0_i32_1 = arith.constant 0 : i32
    return %arg0, %c0_i32, %c0_i32_0 : i32, i32, i32
  }
  func.func @transform_2(%arg0: i32, %arg1: memref<5xi32, #tpu.memory_space<smem>>) -> (i32, i32, i32) {
    %c0_i32 = arith.constant 0 : i32
    %c0_i32_0 = arith.constant 0 : i32
    %c0_i32_1 = arith.constant 0 : i32
    return %arg0, %c0_i32, %c0_i32_0 : i32, i32, i32
  }
  func.func @transform_3(%arg0: i32, %arg1: memref<5xi32, #tpu.memory_space<smem>>) -> (i32, i32) {
    %c0_i32 = arith.constant 0 : i32
    %c0_i32_0 = arith.constant 0 : i32
    return %arg0, %c0_i32 : i32, i32
  }
  func.func @transform_4(%arg0: i32, %arg1: memref<5xi32, #tpu.memory_space<smem>>) -> (i32, i32) {
    %c0_i32 = arith.constant 0 : i32
    %c0_i32_0 = arith.constant 0 : i32
    %c0_i32_1 = arith.constant 0 : i32
    return %c0_i32, %c0_i32_0 : i32, i32
  }
  func.func @transform_5(%arg0: i32, %arg1: memref<5xi32, #tpu.memory_space<smem>>) -> (i32, i32) {
    %c0_i32 = arith.constant 0 : i32
    %c0_i32_0 = arith.constant 0 : i32
    %c0_i32_1 = arith.constant 0 : i32
    return %c0_i32, %c0_i32_0 : i32, i32
  }
  func.func @transform_6(%arg0: i32, %arg1: memref<5xi32, #tpu.memory_space<smem>>) -> (i32, i32) {
    %c0_i32 = arith.constant 0 : i32
    %c0_i32_0 = arith.constant 0 : i32
    %c0_i32_1 = arith.constant 0 : i32
    return %c0_i32, %c0_i32_0 : i32, i32
  }
  func.func @transform_7(%arg0: i32, %arg1: memref<5xi32, #tpu.memory_space<smem>>) -> (i32, i32) {
    %c0_i32 = arith.constant 0 : i32
    %c0_i32_0 = arith.constant 0 : i32
    %c0_i32_1 = arith.constant 0 : i32
    return %c0_i32, %c0_i32_0 : i32, i32
  }
  func.func @transform_8(%arg0: i32, %arg1: memref<5xi32, #tpu.memory_space<smem>>) -> (i32, i32) {
    %c0_i32 = arith.constant 0 : i32
    %c0_i32_0 = arith.constant 0 : i32
    %c0_i32_1 = arith.constant 0 : i32
    return %c0_i32, %c0_i32_0 : i32, i32
  }
  func.func @transform_9(%arg0: i32, %arg1: memref<5xi32, #tpu.memory_space<smem>>) -> (i32, i32) {
    %c0_i32 = arith.constant 0 : i32
    %c0_i32_0 = arith.constant 0 : i32
    %c0_i32_1 = arith.constant 0 : i32
    return %c0_i32, %c0_i32_0 : i32, i32
  }
  func.func @transform_10(%arg0: i32, %arg1: memref<5xi32, #tpu.memory_space<smem>>) -> (i32, i32) {
    %c0_i32 = arith.constant 0 : i32
    %c0_i32_0 = arith.constant 0 : i32
    %c0_i32_1 = arith.constant 0 : i32
    return %c0_i32, %c0_i32_0 : i32, i32
  }
  func.func @transform_11(%arg0: i32, %arg1: memref<5xi32, #tpu.memory_space<smem>>) -> (i32, i32, i32) {
    %c0_i32 = arith.constant 0 : i32
    %c0_i32_0 = arith.constant 0 : i32
    %c0_i32_1 = arith.constant 0 : i32
    return %c0_i32, %arg0, %c0_i32_0 : i32, i32, i32
  }
}

</mosaic_0001>

<llo_original>
// kernel: tpu_custom_call.1
$region0: #{tpu_custom_call.1}
  #allocation0 [shape = 'u32[]', space=smem, size = 0x4, offset = 0x4, fixed_abs, tag = 'smem constant byte address 0x4 - core index']
  #allocation1 [shape = 'u32[144,128]{1,0:T(1,128)}', space=vmem, size = 0x12000, scoped, tag = 'internal scratch']
  #allocation2 [shape = 'f32[8,32]{1,0:T(8,128)}', space=vmem, size = 0x1000, scoped, tag = 'scratch operand']
  #allocation3 [shape = 's32[1]{0}', space=sflag, size = 0x4, scoped, tag = 'scoped memory for tpu_custom_call.1']
  #allocation4 [shape = 'u8[512]{0}', space=smem, size = 0x200, scoped, tag = 'prefetched SMEM operand 0']
  %s0 = inlined_call_operand.hbm [shape: s32[5], index: 0, kind: input, shape index: {}]
  %s1 = inlined_call_operand.hbm [shape: f32[5,8,32], index: 1, kind: input, shape index: {}]
  %s2 = inlined_call_operand.vmem [shape: f32[8,8,16], index: 2, kind: input, shape index: {}]
  %s3 = inlined_call_operand.hbm [shape: f32[8,8,16], index: 3, kind: input, shape index: {}]
  %s4 = inlined_call_operand.vmem [shape: s32[8,1], index: 4, kind: input, shape index: {}]
  %s5 = inlined_call_operand.vmem [shape: bf16[128,32], index: 5, kind: input, shape index: {}]
  %s6 = inlined_call_operand.vmem [shape: bf16[80,128], index: 6, kind: input, shape index: {}]
  %s7 = inlined_call_operand.vmem [shape: f32[1,128], index: 7, kind: input, shape index: {}]
  %s8 = inlined_call_operand.hbm [shape: bf16[48,64], index: 8, kind: input, shape index: {}]
  %s9 = inlined_call_operand.vmem [shape: f32[1,64], index: 9, kind: input, shape index: {}]
  %s10 = inlined_call_operand.vmem [shape: bf16[32,128], index: 10, kind: input, shape index: {}]
  %s11 = inlined_call_operand.vmem [shape: f32[1,128], index: 11, kind: input, shape index: {}]
  %s12 = inlined_call_operand.hbm [shape: f32[5,8,128], index: 12, kind: output, shape index: {}]
  %s13 = sld [smem:[#allocation0]]
  $region81: #{tpu_custom_call.1} parent=0
    _
  %s15 = ssub.s32 1, %s13
  %s16 = scalar_select 0, %s15, %s13
  %18 = dma.hbm_to_smem %s0, 16, [#allocation4], [#allocation3]
  %19 = dma.done [#allocation3], 16
  %20 = sfence
  $region1: #{tpu_custom_call.1} parent=0
    #allocation5 [shape = 'u8[20480]{0}', space=vmem, size = 0x5000, scoped, tag = 'input window, operand 1, single buffered']
    #allocation6 [shape = 's32[1]{0}', space=sflag, size = 0x4, scoped, tag = 'scoped memory for tpu_custom_call.1']
    #allocation7 [shape = 's32[1]{0}', space=sflag, size = 0x4, scoped, tag = 'scoped memory for tpu_custom_call.1']
    #allocation8 [shape = 'u8[32768]{0}', space=vmem, size = 0x8000, scoped, tag = 'input window, operand 3, single buffered']
    #allocation9 [shape = 's32[1]{0}', space=sflag, size = 0x4, scoped, tag = 'scoped memory for tpu_custom_call.1']
    #allocation10 [shape = 'u8[12288]{0}', space=vmem, size = 0x3000, scoped, tag = 'input window, operand 8, single buffered']
    #allocation11 [shape = 'u8[20480]{0}', space=vmem, size = 0x5000, scoped, tag = 'output window, operand 0, single buffered']
    %21 = vsyncpa [#allocation6], 0
    %22 = vsyncpa [#allocation9], 0
    %23 = vsyncpa [#allocation7], 0
    // Predicated region
    $region2: #{tpu_custom_call.1} parent=1 // pred_check
      _
    $region3: #{tpu_custom_call.1} parent=1 // pred_check_branch
      %25 = sbr.rel (0) target = $region5
    $region4: #{tpu_custom_call.1} parent=1 // pred_region
      %s27 = ssub.s32 640, 640
      %28 = vsyncadd [#allocation6], %s27
      %s29 = sshll.u32 [#allocation5], 4
      %s30 = int_to_ptr.vmem [resolvable:$true] %s29
      %35 = dma.hbm_to_vmem [thread:$0]  %s1, 640, %s30, [#allocation6], 128, 128, 8
    $region5: #{tpu_custom_call.1} parent=1 // pred_fallthru
      _
    // Predicated region
    $region6: #{tpu_custom_call.1} parent=1 // pred_check
      _
    $region7: #{tpu_custom_call.1} parent=1 // pred_check_branch
      %37 = sbr.rel (0) target = $region9
    $region8: #{tpu_custom_call.1} parent=1 // pred_region
      _
    $region9: #{tpu_custom_call.1} parent=1 // pred_fallthru
      _
    // Predicated region
    $region10: #{tpu_custom_call.1} parent=1 // pred_check
      _
    $region11: #{tpu_custom_call.1} parent=1 // pred_check_branch
      %39 = sbr.rel (0) target = $region13
    $region12: #{tpu_custom_call.1} parent=1 // pred_region
      %s41 = ssub.s32 1024, 1024
      %42 = vsyncadd [#allocation9], %s41
      %s43 = sshll.u32 [#allocation8], 4
      %s44 = int_to_ptr.vmem [resolvable:$true] %s43
      %49 = dma.hbm_to_vmem [thread:$0]  %s3, 1024, %s44, [#allocation9], 128, 128, 8
    $region13: #{tpu_custom_call.1} parent=1 // pred_fallthru
      _
    // Predicated region
    $region14: #{tpu_custom_call.1} parent=1 // pred_check
      _
    $region15: #{tpu_custom_call.1} parent=1 // pred_check_branch
      %51 = sbr.rel (0) target = $region17
    $region16: #{tpu_custom_call.1} parent=1 // pred_region
      _
    $region17: #{tpu_custom_call.1} parent=1 // pred_fallthru
      _
    // Predicated region
    $region18: #{tpu_custom_call.1} parent=1 // pred_check
      _
    $region19: #{tpu_custom_call.1} parent=1 // pred_check_branch
      %53 = sbr.rel (0) target = $region21
    $region20: #{tpu_custom_call.1} parent=1 // pred_region
      _
    $region21: #{tpu_custom_call.1} parent=1 // pred_fallthru
      _
    // Predicated region
    $region22: #{tpu_custom_call.1} parent=1 // pred_check
      _
    $region23: #{tpu_custom_call.1} parent=1 // pred_check_branch
      %55 = sbr.rel (0) target = $region25
    $region24: #{tpu_custom_call.1} parent=1 // pred_region
      _
    $region25: #{tpu_custom_call.1} parent=1 // pred_fallthru
      _
    // Predicated region
    $region26: #{tpu_custom_call.1} parent=1 // pred_check
      _
    $region27: #{tpu_custom_call.1} parent=1 // pred_check_branch
      %57 = sbr.rel (0) target = $region29
    $region28: #{tpu_custom_call.1} parent=1 // pred_region
      _
    $region29: #{tpu_custom_call.1} parent=1 // pred_fallthru
      _
    // Predicated region
    $region30: #{tpu_custom_call.1} parent=1 // pred_check
      _
    $region31: #{tpu_custom_call.1} parent=1 // pred_check_branch
      %59 = sbr.rel (0) target = $region33
    $region32: #{tpu_custom_call.1} parent=1 // pred_region
      %s61 = ssub.s32 384, 384
      %62 = vsyncadd [#allocation9], %s61
      %s63 = sshll.u32 [#allocation10], 4
      %s64 = int_to_ptr.vmem [resolvable:$true] %s63
      %69 = dma.hbm_to_vmem [thread:$0]  %s8, 384, %s64, [#allocation9], 64, 64, 4
    $region33: #{tpu_custom_call.1} parent=1 // pred_fallthru
      _
    // Predicated region
    $region34: #{tpu_custom_call.1} parent=1 // pred_check
      _
    $region35: #{tpu_custom_call.1} parent=1 // pred_check_branch
      %71 = sbr.rel (0) target = $region37
    $region36: #{tpu_custom_call.1} parent=1 // pred_region
      _
    $region37: #{tpu_custom_call.1} parent=1 // pred_fallthru
      _
    // Predicated region
    $region38: #{tpu_custom_call.1} parent=1 // pred_check
      _
    $region39: #{tpu_custom_call.1} parent=1 // pred_check_branch
      %73 = sbr.rel (0) target = $region41
    $region40: #{tpu_custom_call.1} parent=1 // pred_region
      _
    $region41: #{tpu_custom_call.1} parent=1 // pred_fallthru
      _
    // Predicated region
    $region42: #{tpu_custom_call.1} parent=1 // pred_check
      _
    $region43: #{tpu_custom_call.1} parent=1 // pred_check_branch
      %75 = sbr.rel (0) target = $region45
    $region44: #{tpu_custom_call.1} parent=1 // pred_region
      _
    $region45: #{tpu_custom_call.1} parent=1 // pred_fallthru
      _
    // Predicated region
    $region46: #{tpu_custom_call.1} parent=1 // pred_check
      _
    $region47: #{tpu_custom_call.1} parent=1 // pred_check_branch
      %77 = sbr.rel (0) target = $region49
    $region48: #{tpu_custom_call.1} parent=1 // pred_region
      %78 = dma.done [#allocation6], 640
    $region49: #{tpu_custom_call.1} parent=1 // pred_fallthru
      _
    // Predicated region
    $region50: #{tpu_custom_call.1} parent=1 // pred_check
      _
    $region51: #{tpu_custom_call.1} parent=1 // pred_check_branch
      %80 = sbr.rel (0) target = $region53
    $region52: #{tpu_custom_call.1} parent=1 // pred_region
      %81 = dma.done [#allocation9], 1024
    $region53: #{tpu_custom_call.1} parent=1 // pred_fallthru
      _
    // Predicated region
    $region54: #{tpu_custom_call.1} parent=1 // pred_check
      _
    $region55: #{tpu_custom_call.1} parent=1 // pred_check_branch
      %83 = sbr.rel (0) target = $region57
    $region56: #{tpu_custom_call.1} parent=1 // pred_region
      %84 = dma.done [#allocation9], 384
    $region57: #{tpu_custom_call.1} parent=1 // pred_fallthru
      _
    %v86 = vlaneseq
    %v87 = vand.u32 %v86, 127
    %v88 = vld [vmem:[%s4] sm:$0xff]
    %vm89 = vcmp.eq.s32.totalorder %v87, 33
    %v90 = vsel %vm89, 1, 0
    %v91 = vcvt.s32.f32 %v90
    loop: start=0, step=1, limit=5
    $region58: #{tpu_custom_call.1} parent=1 // loop_pre_header
      _
    $region59: #{tpu_custom_call.1} parent=1 // loop_header
      %s93 = sphi 0, %s97
      %p94 = scmp.ge.s32.totalorder %s93, 5
      %v98 = vphi 0.0, %v404
      %v99 = vphi 0.0, %v398
      %v100 = vphi 0.0, %v508
      %v101 = vphi 0.0, %v502
      %v102 = vphi 0.0, %v799
      %v103 = vphi 0.0, %v806
      %v104 = vphi 0.0, %v813
      %v105 = vphi 0.0, %v820
      %v106 = vphi 0.0, %v827
      %v107 = vphi 0.0, %v834
      %v108 = vphi 0.0, %v841
      %v109 = vphi 0.0, %v848
      %v110 = vphi %v91, %v933
    $region60: #{tpu_custom_call.1} parent=1 // loop_header_branch
      %96 = sbr.rel (%p94) target = $region64
    $region61: #{tpu_custom_call.1} parent=1 // loop_body
      %s111 = sld [smem:[#allocation4 + %s93]]
      %p112 = scmp.eq.s32.totalorder %s111, 1
      // Predicated region
      $region65: #{tpu_custom_call.1} parent=61 // pred_check
        %p113 = pneg %p112
      $region66: #{tpu_custom_call.1} parent=61 // pred_check_branch
        %115 = sbr.rel (%p113) target = $region68
      $region67: #{tpu_custom_call.1} parent=61 // pred_region
        %p116 = scmp.lt.s32.totalorder %s93, 4
        %s117 = scalar_select %p116, %s93, 4
        %s118 = smul.u32 %s117, 8
        %s119 = scalar_lea.vmem [#allocation5], %s118
        %v120 = vld [vmem:[%s119] sm:$0xff]
        %vm121 = vcmask 261120
        %122 = vst.msk [vmem:[#allocation2] sm:$0xff] %vm121, %v120
      $region68: #{tpu_custom_call.1} parent=61 // pred_fallthru
        _
      %p123 = scmp.eq.s32.totalorder %s111, 0
      // Predicated region
      $region69: #{tpu_custom_call.1} parent=61 // pred_check
        %p124 = pneg %p123
      $region70: #{tpu_custom_call.1} parent=61 // pred_check_branch
        %126 = sbr.rel (%p124) target = $region72
      $region71: #{tpu_custom_call.1} parent=61 // pred_region
        %127 = vmax.xlane.f32.xlu0 %v110
        %v128 = vpop.xlane.xlu0 %127
        %vm129 = vcmp.eq.f32.partialorder %v110, %v128
        %v130 = vsel %vm129, %v87, 128
        %v131 = vand.u32 %v130, 65535
        %v132 = vshra.s32 %v130, 16
        %v133 = vcvt.s32.f32 %v131
        %v134 = vcvt.s32.f32 %v132
        %135 = vmin.xlane.f32.xlu0 %v134
        %v136 = vpop.xlane.xlu0 %135
        %vm137 = vcmp.eq.f32.partialorder %v134, %v136
        %v138 = vsel %vm137, %v133, inf
        %139 = vmin.xlane.f32.xlu0 %v138
        %v140 = vpop.xlane.xlu0 %139
        %v141 = vcvt.f32.s32 %v140
        %v142 = vcvt.f32.s32 %v136
        %v143 = vshll.u32 %v142, 16
        %v144 = vadd.s32 %v143, %v141
        %vm145 = vcmp.eq.s32.totalorder %v87, %v144
        %v146 = vsel %vm145, 1, 0
        %v147 = vcvt.s32.f32 %v146
        %v148 = vpack.c.bf16 %v147, %v147
        %v149 = vld [vmem:[%s5] sm:$0xf]
        %v150 = vld [vmem:[%s5 + $0x4] sm:$0xf]
        %v151 = vld [vmem:[%s5 + $0x8] sm:$0xf]
        %v152 = vld [vmem:[%s5 + $0xc] sm:$0xf]
        %v153 = vld [vmem:[%s5 + $0x10] sm:$0xf]
        %v154 = vld [vmem:[%s5 + $0x14] sm:$0xf]
        %v155 = vld [vmem:[%s5 + $0x18] sm:$0xf]
        %v156 = vld [vmem:[%s5 + $0x1c] sm:$0xf]
        %v157 = vld [vmem:[%s5 + $0x20] sm:$0xf]
        %v158 = vld [vmem:[%s5 + $0x24] sm:$0xf]
        %v159 = vld [vmem:[%s5 + $0x28] sm:$0xf]
        %v160 = vld [vmem:[%s5 + $0x2c] sm:$0xf]
        %v161 = vld [vmem:[%s5 + $0x30] sm:$0xf]
        %v162 = vld [vmem:[%s5 + $0x34] sm:$0xf]
        %v163 = vld [vmem:[%s5 + $0x38] sm:$0xf]
        %v164 = vld [vmem:[%s5 + $0x3c] sm:$0xf]
        %v181 = vunpack.c.l.b16 %v149
        %v182 = vunpack.c.l.b16 %v150
        %v183 = vunpack.c.l.b16 %v151
        %v184 = vunpack.c.l.b16 %v152
        %v185 = vunpack.c.l.b16 %v153
        %v186 = vunpack.c.l.b16 %v154
        %v187 = vunpack.c.l.b16 %v155
        %v188 = vunpack.c.l.b16 %v156
        %v189 = vunpack.c.l.b16 %v157
        %v190 = vunpack.c.l.b16 %v158
        %v191 = vunpack.c.l.b16 %v159
        %v192 = vunpack.c.l.b16 %v160
        %v193 = vunpack.c.l.b16 %v161
        %v194 = vunpack.c.l.b16 %v162
        %v195 = vunpack.c.l.b16 %v163
        %v196 = vunpack.c.l.b16 %v164
        %v197 = vpack.c.b16 %v182, %v181
        %v198 = vpack.c.b16 %v184, %v183
        %v199 = vpack.c.b16 %v186, %v185
        %v200 = vpack.c.b16 %v188, %v187
        %v201 = vpack.c.b16 %v190, %v189
        %v202 = vpack.c.b16 %v192, %v191
        %v203 = vpack.c.b16 %v194, %v193
        %v204 = vpack.c.b16 %v196, %v195
        %213 = vmatprep.subr.bf16.mxu0 0
        %214 = vmatpush1.bf16.msra.mxu0 %v197
        %215 = vmatprep.subr.bf16.mxu0 0
        %216 = vmatpush1.bf16.msra.mxu0 %v198
        %217 = vmatprep.subr.bf16.mxu0 0
        %218 = vmatpush1.bf16.msra.mxu0 %v199
        %219 = vmatprep.subr.bf16.mxu0 0
        %220 = vmatpush1.bf16.msra.mxu0 %v200
        %221 = vmatprep.subr.bf16.mxu0 0
        %222 = vmatpush1.bf16.msra.mxu0 %v201
        %223 = vmatprep.subr.bf16.mxu0 0
        %224 = vmatpush1.bf16.msra.mxu0 %v202
        %225 = vmatprep.subr.bf16.mxu0 0
        %226 = vmatpush1.bf16.msra.mxu0 %v203
        %227 = vmatprep.subr.bf16.mxu0 0
        %228 = vmatpush1.bf16.msra.mxu0 %v204
        %229 = vmatprep.subr.bf16.mxu0 0
        %230 = vmatpush1.bf16.msra.mxu0 0
        %231 = vmatprep.subr.bf16.mxu0 0
        %232 = vmatpush1.bf16.msra.mxu0 0
        %233 = vmatprep.subr.bf16.mxu0 0
        %234 = vmatpush1.bf16.msra.mxu0 0
        %235 = vmatprep.subr.bf16.mxu0 0
        %236 = vmatpush1.bf16.msra.mxu0 0
        %237 = vmatprep.subr.bf16.mxu0 0
        %238 = vmatpush1.bf16.msra.mxu0 0
        %239 = vmatprep.subr.bf16.mxu0 0
        %240 = vmatpush1.bf16.msra.mxu0 0
        %241 = vmatprep.subr.bf16.mxu0 0
        %242 = vmatpush1.bf16.msra.mxu0 0
        %243 = vmatprep.subr.bf16.mxu0 0
        %244 = vmatpush1.bf16.msra.mxu0 0
        %245 = vmatprep.mubr.bf16.mxu0 0
        %246 = vmatmul.mubr.bf16.gmra.mrb[0].mxu0 %v148
        %v247 = vpop.f32.mrb[0].mxu0
        %v248 = vadd.f32 0.0, %v247
        %v249 = vpop.f32.mrb[0].mxu0
        %v250 = vpop.f32.mrb[0].mxu0
        %v251 = vpop.f32.mrb[0].mxu0
        %252 = vdwg.mxu0
        %vm253 = vcmask 261120
        %254 = vst.msk [vmem:[#allocation2] sm:$0xff] %vm253, %v248
      $region72: #{tpu_custom_call.1} parent=61 // pred_fallthru
        _
      %v255 = vld [vmem:[#allocation2] sm:$0xff]
      %vm264 = vcmask 1041409
      %v265 = vsel %vm264, %v103, %v102
      %vm266 = vcmask 1042434
      %v267 = vsel %vm266, %v104, %v265
      %vm268 = vcmask 1043459
      %v269 = vsel %vm268, %v105, %v267
      %vm270 = vcmask 1044484
      %v271 = vsel %vm270, %v106, %v269
      %vm272 = vcmask 1045509
      %v273 = vsel %vm272, %v107, %v271
      %vm274 = vcmask 1046534
      %v275 = vsel %vm274, %v108, %v273
      %vm276 = vcmask 1047559
      %v277 = vsel %vm276, %v109, %v275
      %278 = vrot.lane.b32.xlu0 %v277, 32
      %v279 = vpop.permute.xlu0 %278
      %282 = vrot.lane.b32.xlu0 %v98, 112
      %v283 = vpop.permute.xlu0 %282
      %vm285 = vcmask 261120
      %v286 = vsel %vm285, %v255, %v279
      %vm287 = vcmask 392192
      %v288 = vsel %vm287, %v286, %v283
      %v289 = vpack.c.bf16 %v288, %v288
      %v290 = vld [vmem:[%s6] sm:$0xf]
      %v291 = vld [vmem:[%s6 + $0x4] sm:$0xf]
      %v292 = vld [vmem:[%s6 + $0x8] sm:$0xf]
      %v293 = vld [vmem:[%s6 + $0xc] sm:$0xf]
      %v294 = vld [vmem:[%s6 + $0x10] sm:$0xf]
      %v295 = vld [vmem:[%s6 + $0x14] sm:$0xf]
      %v296 = vld [vmem:[%s6 + $0x18] sm:$0xf]
      %v297 = vld [vmem:[%s6 + $0x1c] sm:$0xf]
      %v298 = vld [vmem:[%s6 + $0x20] sm:$0xf]
      %v299 = vld [vmem:[%s6 + $0x24] sm:$0xf]
      %v300 = vld [vmem:[%s7] sm:$0x1]
      %v302 = vlaneseq
      %v303 = vshrl.u32 %v302, 7
      %v304 = vsub.s32 0, %v303
      %v305 = vrot.slane %v300, %v304
      %v317 = vunpack.c.l.b16 %v290
      %v318 = vunpack.c.l.b16 %v291
      %v319 = vunpack.c.l.b16 %v292
      %v320 = vunpack.c.l.b16 %v293
      %v321 = vunpack.c.l.b16 %v294
      %v322 = vunpack.c.l.b16 %v295
      %v323 = vunpack.c.l.b16 %v296
      %v324 = vunpack.c.l.b16 %v297
      %v325 = vunpack.c.l.b16 %v298
      %v326 = vunpack.c.l.b16 %v299
      %v327 = vpack.c.b16 %v318, %v317
      %v328 = vpack.c.b16 %v320, %v319
      %v329 = vpack.c.b16 %v322, %v321
      %v330 = vpack.c.b16 %v324, %v323
      %v331 = vpack.c.b16 %v326, %v325
      %vm337 = vcmask 654336
      %v339 = vsel %vm337, %v289, 0
      %341 = vmatprep.subr.bf16.mxu0 0
      %342 = vmatpush1.bf16.msra.mxu0 %v327
      %343 = vmatprep.subr.bf16.mxu0 0
      %344 = vmatpush1.bf16.msra.mxu0 %v328
      %345 = vmatprep.subr.bf16.mxu0 0
      %346 = vmatpush1.bf16.msra.mxu0 %v329
      %347 = vmatprep.subr.bf16.mxu0 0
      %348 = vmatpush1.bf16.msra.mxu0 %v330
      %349 = vmatprep.subr.bf16.mxu0 0
      %350 = vmatpush1.bf16.msra.mxu0 %v331
      %351 = vmatprep.subr.bf16.mxu0 0
      %352 = vmatpush1.bf16.msra.mxu0 0
      %353 = vmatprep.subr.bf16.mxu0 0
      %354 = vmatpush1.bf16.msra.mxu0 0
      %355 = vmatprep.subr.bf16.mxu0 0
      %356 = vmatpush1.bf16.msra.mxu0 0
      %357 = vmatprep.subr.bf16.mxu0 0
      %358 = vmatpush1.bf16.msra.mxu0 0
      %359 = vmatprep.subr.bf16.mxu0 0
      %360 = vmatpush1.bf16.msra.mxu0 0
      %361 = vmatprep.subr.bf16.mxu0 0
      %362 = vmatpush1.bf16.msra.mxu0 0
      %363 = vmatprep.subr.bf16.mxu0 0
      %364 = vmatpush1.bf16.msra.mxu0 0
      %365 = vmatprep.subr.bf16.mxu0 0
      %366 = vmatpush1.bf16.msra.mxu0 0
      %367 = vmatprep.subr.bf16.mxu0 0
      %368 = vmatpush1.bf16.msra.mxu0 0
      %369 = vmatprep.subr.bf16.mxu0 0
      %370 = vmatpush1.bf16.msra.mxu0 0
      %371 = vmatprep.subr.bf16.mxu0 0
      %372 = vmatpush1.bf16.msra.mxu0 0
      %373 = vmatprep.mubr.bf16.mxu0 0
      %374 = vmatmul.mubr.bf16.gmra.mrb[0].mxu0 %v339
      %v375 = vpop.f32.mrb[0].mxu0
      %v376 = vadd.f32 %v305, %v375
      %v377 = vpop.f32.mrb[0].mxu0
      %v378 = vpop.f32.mrb[0].mxu0
      %v379 = vpop.f32.mrb[0].mxu0
      %380 = vdwg.mxu0
      %v381 = vxor.u32 %v376, 2147483648
      %v382 = vmul.f32 %v381, 1.442695
      %v383 = vpow.pop %v382
      %v384 = vadd.f32 %v383, 1.0
      %v385 = vrcp.pop %v384
      %v386 = vmul.f32 1.0, %v385
      %v387 = vtanh.pop %v376
      %v388 = vmul.f32 %v386, %v99
      %390 = vrot.lane.b32.xlu0 %v387, 32
      %v391 = vpop.permute.xlu0 %390
      %v393 = vmul.f32 %v386, %v391
      %395 = vrot.lane.b32.xlu0 %v393, 32
      %v396 = vpop.permute.xlu0 %395
      %v398 = vadd.f32 %v388, %v396
      %v399 = vtanh.pop %v398
      %401 = vrot.lane.b32.xlu0 %v399, 32
      %v402 = vpop.permute.xlu0 %401
      %v404 = vmul.f32 %v386, %v402
      %406 = vrot.lane.b32.xlu0 %v404, 64
      %v407 = vpop.permute.xlu0 %406
      %v409 = vsel %vm285, %v407, %v100
      %v410 = vpack.c.bf16 %v409, %v409
      %v411 = vld [vmem:[#allocation10] sm:$0xf]
      %v412 = vld [vmem:[#allocation10 + $0x4] sm:$0xf]
      %v413 = vld [vmem:[#allocation10 + $0x8] sm:$0xf]
      %v414 = vld [vmem:[#allocation10 + $0xc] sm:$0xf]
      %v415 = vld [vmem:[#allocation10 + $0x10] sm:$0xf]
      %v416 = vld [vmem:[#allocation10 + $0x14] sm:$0xf]
      %v417 = vld [vmem:[%s9] sm:$0x1]
      %v419 = vlaneseq
      %v420 = vshrl.u32 %v419, 7
      %v421 = vsub.s32 0, %v420
      %v422 = vrot.slane %v417, %v421
      %v430 = vunpack.c.l.b16 %v411
      %v431 = vunpack.c.l.b16 %v412
      %v432 = vunpack.c.l.b16 %v413
      %v433 = vunpack.c.l.b16 %v414
      %v434 = vunpack.c.l.b16 %v415
      %v435 = vunpack.c.l.b16 %v416
      %v436 = vpack.c.b16 %v431, %v430
      %v437 = vpack.c.b16 %v433, %v432
      %v438 = vpack.c.b16 %v435, %v434
      %v443 = vsel %vm287, %v410, 0
      %445 = vmatprep.subr.bf16.mxu0 0
      %446 = vmatpush1.bf16.msra.mxu0 %v436
      %447 = vmatprep.subr.bf16.mxu0 0
      %448 = vmatpush1.bf16.msra.mxu0 %v437
      %449 = vmatprep.subr.bf16.mxu0 0
      %450 = vmatpush1.bf16.msra.mxu0 %v438
      %451 = vmatprep.subr.bf16.mxu0 0
      %452 = vmatpush1.bf16.msra.mxu0 0
      %453 = vmatprep.subr.bf16.mxu0 0
      %454 = vmatpush1.bf16.msra.mxu0 0
      %455 = vmatprep.subr.bf16.mxu0 0
      %456 = vmatpush1.bf16.msra.mxu0 0
      %457 = vmatprep.subr.bf16.mxu0 0
      %458 = vmatpush1.bf16.msra.mxu0 0
      %459 = vmatprep.subr.bf16.mxu0 0
      %460 = vmatpush1.bf16.msra.mxu0 0
      %461 = vmatprep.subr.bf16.mxu0 0
      %462 = vmatpush1.bf16.msra.mxu0 0
      %463 = vmatprep.subr.bf16.mxu0 0
      %464 = vmatpush1.bf16.msra.mxu0 0
      %465 = vmatprep.subr.bf16.mxu0 0
      %466 = vmatpush1.bf16.msra.mxu0 0
      %467 = vmatprep.subr.bf16.mxu0 0
      %468 = vmatpush1.bf16.msra.mxu0 0
      %469 = vmatprep.subr.bf16.mxu0 0
      %470 = vmatpush1.bf16.msra.mxu0 0
      %471 = vmatprep.subr.bf16.mxu0 0
      %472 = vmatpush1.bf16.msra.mxu0 0
      %473 = vmatprep.subr.bf16.mxu0 0
      %474 = vmatpush1.bf16.msra.mxu0 0
      %475 = vmatprep.subr.bf16.mxu0 0
      %476 = vmatpush1.bf16.msra.mxu0 0
      %477 = vmatprep.mubr.bf16.mxu0 0
      %478 = vmatmul.mubr.bf16.gmra.mrb[0].mxu0 %v443
      %v479 = vpop.f32.mrb[0].mxu0
      %v480 = vadd.f32 %v422, %v479
      %v481 = vpop.f32.mrb[0].mxu0
      %v482 = vpop.f32.mrb[0].mxu0
      %v483 = vpop.f32.mrb[0].mxu0
      %484 = vdwg.mxu0
      %v485 = vxor.u32 %v480, 2147483648
      %v486 = vmul.f32 %v485, 1.442695
      %v487 = vpow.pop %v486
      %v488 = vadd.f32 %v487, 1.0
      %v489 = vrcp.pop %v488
      %v490 = vmul.f32 1.0, %v489
      %v491 = vtanh.pop %v480
      %v492 = vmul.f32 %v490, %v101
      %494 = vrot.lane.b32.xlu0 %v491, 80
      %v495 = vpop.permute.xlu0 %494
      %v497 = vmul.f32 %v490, %v495
      %499 = vrot.lane.b32.xlu0 %v497, 16
      %v500 = vpop.permute.xlu0 %499
      %v502 = vadd.f32 %v492, %v500
      %v503 = vtanh.pop %v502
      %505 = vrot.lane.b32.xlu0 %v503, 16
      %v506 = vpop.permute.xlu0 %505
      %v508 = vmul.f32 %v490, %v506
      %v509 = vld [vmem:[%s2] sm:$0xff]
      %v510 = vld [vmem:[%s2 + $0x8] sm:$0xff]
      %v511 = vld [vmem:[%s2 + $0x10] sm:$0xff]
      %v512 = vld [vmem:[%s2 + $0x18] sm:$0xff]
      %v513 = vld [vmem:[%s2 + $0x20] sm:$0xff]
      %v514 = vld [vmem:[%s2 + $0x28] sm:$0xff]
      %v515 = vld [vmem:[%s2 + $0x30] sm:$0xff]
      %v516 = vld [vmem:[%s2 + $0x38] sm:$0xff]
      %v518 = vcombine.high %v508, %v508
      %v520 = vunpack.c.l.s4 1966171168
      %v521 = vunpack.c.0.s8 %v520
      %v522 = vlaneseq
      %v523 = vshrl.u32 %v522, 7
      %v524 = vsub.s32 %v521, %v523
      %v525 = vrot.slane %v508, %v524
      %v527 = vunpack.c.l.s4 1966171168
      %v528 = vunpack.c.0.s8 %v527
      %v529 = vlaneseq
      %v530 = vshrl.u32 %v529, 7
      %v531 = vsub.s32 %v528, %v530
      %v532 = vrot.slane %v518, %v531
      %v533 = vcombine.high %v525, %v525
      %v534 = vcombine.high %v532, %v532
      %v536 = vunpack.c.l.s4 1966171168
      %v537 = vunpack.c.0.s8 %v536
      %v538 = vlaneseq
      %v539 = vshrl.u32 %v538, 7
      %v540 = vsub.s32 %v537, %v539
      %v541 = vrot.slane %v525, %v540
      %v543 = vunpack.c.l.s4 1966171168
      %v544 = vunpack.c.0.s8 %v543
      %v545 = vlaneseq
      %v546 = vshrl.u32 %v545, 7
      %v547 = vsub.s32 %v544, %v546
      %v548 = vrot.slane %v532, %v547
      %v550 = vunpack.c.l.s4 1966171168
      %v551 = vunpack.c.0.s8 %v550
      %v552 = vlaneseq
      %v553 = vshrl.u32 %v552, 7
      %v554 = vsub.s32 %v551, %v553
      %v555 = vrot.slane %v533, %v554
      %v557 = vunpack.c.l.s4 1966171168
      %v558 = vunpack.c.0.s8 %v557
      %v559 = vlaneseq
      %v560 = vshrl.u32 %v559, 7
      %v561 = vsub.s32 %v558, %v560
      %v562 = vrot.slane %v534, %v561
      %v563 = vcombine.high %v541, %v541
      %v564 = vcombine.high %v548, %v548
      %v565 = vcombine.high %v555, %v555
      %v566 = vcombine.high %v562, %v562
      %v567 = vlaneseq
      %v568 = vshrl.u32 %v567, 7
      %v569 = vsub.s32 0, %v568
      %v570 = vrot.slane %v541, %v569
      %v571 = vlaneseq
      %v572 = vshrl.u32 %v571, 7
      %v573 = vsub.s32 0, %v572
      %v574 = vrot.slane %v555, %v573
      %v575 = vlaneseq
      %v576 = vshrl.u32 %v575, 7
      %v577 = vsub.s32 0, %v576
      %v578 = vrot.slane %v563, %v577
      %v579 = vlaneseq
      %v580 = vshrl.u32 %v579, 7
      %v581 = vsub.s32 0, %v580
      %v582 = vrot.slane %v565, %v581
      %v583 = vlaneseq
      %v584 = vshrl.u32 %v583, 7
      %v585 = vsub.s32 0, %v584
      %v586 = vrot.slane %v548, %v585
      %v587 = vlaneseq
      %v588 = vshrl.u32 %v587, 7
      %v589 = vsub.s32 0, %v588
      %v590 = vrot.slane %v562, %v589
      %v591 = vlaneseq
      %v592 = vshrl.u32 %v591, 7
      %v593 = vsub.s32 0, %v592
      %v594 = vrot.slane %v564, %v593
      %v595 = vlaneseq
      %v596 = vshrl.u32 %v595, 7
      %v597 = vsub.s32 0, %v596
      %v598 = vrot.slane %v566, %v597
      %599 = vrot.lane.b32.xlu0 %v570, 96
      %v600 = vpop.permute.xlu0 %599
      %601 = vrot.lane.b32.xlu0 %v574, 96
      %v602 = vpop.permute.xlu0 %601
      %603 = vrot.lane.b32.xlu0 %v578, 96
      %v604 = vpop.permute.xlu0 %603
      %605 = vrot.lane.b32.xlu0 %v582, 96
      %v606 = vpop.permute.xlu0 %605
      %607 = vrot.lane.b32.xlu0 %v586, 96
      %v608 = vpop.permute.xlu0 %607
      %609 = vrot.lane.b32.xlu0 %v590, 96
      %v610 = vpop.permute.xlu0 %609
      %611 = vrot.lane.b32.xlu0 %v594, 96
      %v612 = vpop.permute.xlu0 %611
      %613 = vrot.lane.b32.xlu0 %v598, 96
      %v614 = vpop.permute.xlu0 %613
      %v623 = vmul.f32 %v509, %v600
      %v624 = vmul.f32 %v510, %v602
      %v625 = vmul.f32 %v511, %v604
      %v626 = vmul.f32 %v512, %v606
      %v627 = vmul.f32 %v513, %v608
      %v628 = vmul.f32 %v514, %v610
      %v629 = vmul.f32 %v515, %v612
      %v630 = vmul.f32 %v516, %v614
      %vm631 = vcmask 130048
      %v632 = vsel %vm631, %v623, 0.0
      %633 = vadd.xlane.f32.xlu0 %v632
      %v634 = vpop.xlane.xlu0 %633
      %v635 = vsel %vm631, %v624, 0.0
      %636 = vadd.xlane.f32.xlu0 %v635
      %v637 = vpop.xlane.xlu0 %636
      %v638 = vsel %vm631, %v625, 0.0
      %639 = vadd.xlane.f32.xlu0 %v638
      %v640 = vpop.xlane.xlu0 %639
      %v641 = vsel %vm631, %v626, 0.0
      %642 = vadd.xlane.f32.xlu0 %v641
      %v643 = vpop.xlane.xlu0 %642
      %v644 = vsel %vm631, %v627, 0.0
      %645 = vadd.xlane.f32.xlu0 %v644
      %v646 = vpop.xlane.xlu0 %645
      %v647 = vsel %vm631, %v628, 0.0
      %648 = vadd.xlane.f32.xlu0 %v647
      %v649 = vpop.xlane.xlu0 %648
      %v650 = vsel %vm631, %v629, 0.0
      %651 = vadd.xlane.f32.xlu0 %v650
      %v652 = vpop.xlane.xlu0 %651
      %v653 = vsel %vm631, %v630, 0.0
      %654 = vadd.xlane.f32.xlu0 %v653
      %v655 = vpop.xlane.xlu0 %654
      %656 = vset.pattern.permute.xlu0 0
      %657 = vperm.xlu0 %656, %v88
      %v658 = vpop.permute.xlu0 %657
      %vm659 = vcmp.ge.s32.totalorder %v87, %v658
      %v668 = vlaneseq
      %v669 = vshrl.u32 %v668, 7
      %v670 = vsub.s32 %v87, %v669
      %v671 = vrot.slane %v634, %v670
      %v672 = vlaneseq
      %v673 = vshrl.u32 %v672, 7
      %v674 = vsub.s32 %v87, %v673
      %v675 = vrot.slane %v637, %v674
      %v676 = vlaneseq
      %v677 = vshrl.u32 %v676, 7
      %v678 = vsub.s32 %v87, %v677
      %v679 = vrot.slane %v640, %v678
      %v680 = vlaneseq
      %v681 = vshrl.u32 %v680, 7
      %v682 = vsub.s32 %v87, %v681
      %v683 = vrot.slane %v643, %v682
      %v684 = vlaneseq
      %v685 = vshrl.u32 %v684, 7
      %v686 = vsub.s32 %v87, %v685
      %v687 = vrot.slane %v646, %v686
      %v688 = vlaneseq
      %v689 = vshrl.u32 %v688, 7
      %v690 = vsub.s32 %v87, %v689
      %v691 = vrot.slane %v649, %v690
      %v692 = vlaneseq
      %v693 = vshrl.u32 %v692, 7
      %v694 = vsub.s32 %v87, %v693
      %v695 = vrot.slane %v652, %v694
      %v696 = vlaneseq
      %v697 = vshrl.u32 %v696, 7
      %v698 = vsub.s32 %v87, %v697
      %v699 = vrot.slane %v655, %v698
      %v700 = vsel %vm264, %v675, %v671
      %v701 = vsel %vm266, %v679, %v700
      %v702 = vsel %vm268, %v683, %v701
      %v703 = vsel %vm270, %v687, %v702
      %v704 = vsel %vm272, %v691, %v703
      %v705 = vsel %vm274, %v695, %v704
      %v706 = vsel %vm276, %v699, %v705
      %v708 = vsel %vm659, -1e+09, %v706
      %vm709 = vcmask 64512
      %v710 = vsel %vm709, %v708, -inf
      %711 = vmax.xlane.f32.xlu0 %v710
      %v712 = vpop.xlane.xlu0 %711
      %v713 = vsub.f32 %v708, %v712
      %v714 = vmul.f32 %v713, 1.442695
      %v715 = vpow.pop %v714
      %v716 = vsel %vm709, %v715, 0.0
      %717 = vadd.xlane.f32.xlu0 %v716
      %v718 = vpop.xlane.xlu0 %717
      %v719 = vrcp.pop %v718
      %v720 = vmul.f32 %v715, %v719
      %v721 = vlaneseq
      %v722 = vshrl.u32 %v721, 7
      %v723 = vsub.s32 0, %v722
      %v724 = vrot.slane %v720, %v723
      %726 = vbcast.lane.b32.xlu0 %v724, 256
      %v727 = vpop.permute.xlu0 %726
      %v728 = vlaneseq
      %v729 = vshrl.u32 %v728, 7
      %v730 = vsub.s32 1, %v729
      %v731 = vrot.slane %v720, %v730
      %733 = vbcast.lane.b32.xlu0 %v731, 256
      %v734 = vpop.permute.xlu0 %733
      %v735 = vlaneseq
      %v736 = vshrl.u32 %v735, 7
      %v737 = vsub.s32 2, %v736
      %v738 = vrot.slane %v720, %v737
      %740 = vbcast.lane.b32.xlu0 %v738, 256
      %v741 = vpop.permute.xlu0 %740
      %v742 = vlaneseq
      %v743 = vshrl.u32 %v742, 7
      %v744 = vsub.s32 3, %v743
      %v745 = vrot.slane %v720, %v744
      %747 = vbcast.lane.b32.xlu0 %v745, 256
      %v748 = vpop.permute.xlu0 %747
      %v749 = vlaneseq
      %v750 = vshrl.u32 %v749, 7
      %v751 = vsub.s32 4, %v750
      %v752 = vrot.slane %v720, %v751
      %754 = vbcast.lane.b32.xlu0 %v752, 256
      %v755 = vpop.permute.xlu0 %754
      %v756 = vlaneseq
      %v757 = vshrl.u32 %v756, 7
      %v758 = vsub.s32 5, %v757
      %v759 = vrot.slane %v720, %v758
      %761 = vbcast.lane.b32.xlu0 %v759, 256
      %v762 = vpop.permute.xlu0 %761
      %v763 = vlaneseq
      %v764 = vshrl.u32 %v763, 7
      %v765 = vsub.s32 6, %v764
      %v766 = vrot.slane %v720, %v765
      %768 = vbcast.lane.b32.xlu0 %v766, 256
      %v769 = vpop.permute.xlu0 %768
      %v770 = vlaneseq
      %v771 = vshrl.u32 %v770, 7
      %v772 = vsub.s32 7, %v771
      %v773 = vrot.slane %v720, %v772
      %775 = vbcast.lane.b32.xlu0 %v773, 256
      %v776 = vpop.permute.xlu0 %775
      %v777 = vld [vmem:[#allocation8] sm:$0xff]
      %v778 = vld [vmem:[#allocation8 + $0x8] sm:$0xff]
      %v779 = vld [vmem:[#allocation8 + $0x10] sm:$0xff]
      %v780 = vld [vmem:[#allocation8 + $0x18] sm:$0xff]
      %v781 = vld [vmem:[#allocation8 + $0x20] sm:$0xff]
      %v782 = vld [vmem:[#allocation8 + $0x28] sm:$0xff]
      %v783 = vld [vmem:[#allocation8 + $0x30] sm:$0xff]
      %v784 = vld [vmem:[#allocation8 + $0x38] sm:$0xff]
      %v785 = vmul.f32 %v727, %v777
      %v786 = vmul.f32 %v734, %v778
      %v787 = vmul.f32 %v741, %v779
      %v788 = vmul.f32 %v748, %v780
      %v789 = vmul.f32 %v755, %v781
      %v790 = vmul.f32 %v762, %v782
      %v791 = vmul.f32 %v769, %v783
      %v792 = vmul.f32 %v776, %v784
      %v793 = vsel %vm631, %v785, 0.0
      %v794 = vrot.slane %v793, 4
      %v795 = vadd.f32 %v793, %v794
      %v796 = vrot.slane %v795, 2
      %v797 = vadd.f32 %v795, %v796
      %v798 = vrot.slane %v797, 1
      %v799 = vadd.f32 %v797, %v798
      %v800 = vsel %vm631, %v786, 0.0
      %v801 = vrot.slane %v800, 4
      %v802 = vadd.f32 %v800, %v801
      %v803 = vrot.slane %v802, 2
      %v804 = vadd.f32 %v802, %v803
      %v805 = vrot.slane %v804, 1
      %v806 = vadd.f32 %v804, %v805
      %v807 = vsel %vm631, %v787, 0.0
      %v808 = vrot.slane %v807, 4
      %v809 = vadd.f32 %v807, %v808
      %v810 = vrot.slane %v809, 2
      %v811 = vadd.f32 %v809, %v810
      %v812 = vrot.slane %v811, 1
      %v813 = vadd.f32 %v811, %v812
      %v814 = vsel %vm631, %v788, 0.0
      %v815 = vrot.slane %v814, 4
      %v816 = vadd.f32 %v814, %v815
      %v817 = vrot.slane %v816, 2
      %v818 = vadd.f32 %v816, %v817
      %v819 = vrot.slane %v818, 1
      %v820 = vadd.f32 %v818, %v819
      %v821 = vsel %vm631, %v789, 0.0
      %v822 = vrot.slane %v821, 4
      %v823 = vadd.f32 %v821, %v822
      %v824 = vrot.slane %v823, 2
      %v825 = vadd.f32 %v823, %v824
      %v826 = vrot.slane %v825, 1
      %v827 = vadd.f32 %v825, %v826
      %v828 = vsel %vm631, %v790, 0.0
      %v829 = vrot.slane %v828, 4
      %v830 = vadd.f32 %v828, %v829
      %v831 = vrot.slane %v830, 2
      %v832 = vadd.f32 %v830, %v831
      %v833 = vrot.slane %v832, 1
      %v834 = vadd.f32 %v832, %v833
      %v835 = vsel %vm631, %v791, 0.0
      %v836 = vrot.slane %v835, 4
      %v837 = vadd.f32 %v835, %v836
      %v838 = vrot.slane %v837, 2
      %v839 = vadd.f32 %v837, %v838
      %v840 = vrot.slane %v839, 1
      %v841 = vadd.f32 %v839, %v840
      %v842 = vsel %vm631, %v792, 0.0
      %v843 = vrot.slane %v842, 4
      %v844 = vadd.f32 %v842, %v843
      %v845 = vrot.slane %v844, 2
      %v846 = vadd.f32 %v844, %v845
      %v847 = vrot.slane %v846, 1
      %v848 = vadd.f32 %v846, %v847
      %849 = vrot.lane.b32.xlu0 %v508, 96
      %v850 = vpop.permute.xlu0 %849
      %v860 = vsel %vm264, %v806, %v799
      %v861 = vsel %vm266, %v813, %v860
      %v862 = vsel %vm268, %v820, %v861
      %v863 = vsel %vm270, %v827, %v862
      %v864 = vsel %vm272, %v834, %v863
      %v865 = vsel %vm274, %v841, %v864
      %v866 = vsel %vm276, %v848, %v865
      %867 = vrot.lane.b32.xlu0 %v866, 16
      %v868 = vpop.permute.xlu0 %867
      %v870 = vsel %vm631, %v850, %v868
      %v871 = vpack.c.bf16 %v870, %v870
      %v872 = vld [vmem:[%s10] sm:$0xf]
      %v873 = vld [vmem:[%s10 + $0x4] sm:$0xf]
      %v874 = vld [vmem:[%s10 + $0x8] sm:$0xf]
      %v875 = vld [vmem:[%s10 + $0xc] sm:$0xf]
      %v876 = vld [vmem:[%s11] sm:$0x1]
      %v878 = vlaneseq
      %v879 = vshrl.u32 %v878, 7
      %v880 = vsub.s32 0, %v879
      %v881 = vrot.slane %v876, %v880
      %v887 = vunpack.c.l.b16 %v872
      %v888 = vunpack.c.l.b16 %v873
      %v889 = vunpack.c.l.b16 %v874
      %v890 = vunpack.c.l.b16 %v875
      %v891 = vpack.c.b16 %v888, %v887
      %v892 = vpack.c.b16 %v890, %v889
      %v896 = vsel %vm285, %v871, 0
      %898 = vmatprep.subr.bf16.mxu0 0
      %899 = vmatpush1.bf16.msra.mxu0 %v891
      %900 = vmatprep.subr.bf16.mxu0 0
      %901 = vmatpush1.bf16.msra.mxu0 %v892
      %902 = vmatprep.subr.bf16.mxu0 0
      %903 = vmatpush1.bf16.msra.mxu0 0
      %904 = vmatprep.subr.bf16.mxu0 0
      %905 = vmatpush1.bf16.msra.mxu0 0
      %906 = vmatprep.subr.bf16.mxu0 0
      %907 = vmatpush1.bf16.msra.mxu0 0
      %908 = vmatprep.subr.bf16.mxu0 0
      %909 = vmatpush1.bf16.msra.mxu0 0
      %910 = vmatprep.subr.bf16.mxu0 0
      %911 = vmatpush1.bf16.msra.mxu0 0
      %912 = vmatprep.subr.bf16.mxu0 0
      %913 = vmatpush1.bf16.msra.mxu0 0
      %914 = vmatprep.subr.bf16.mxu0 0
      %915 = vmatpush1.bf16.msra.mxu0 0
      %916 = vmatprep.subr.bf16.mxu0 0
      %917 = vmatpush1.bf16.msra.mxu0 0
      %918 = vmatprep.subr.bf16.mxu0 0
      %919 = vmatpush1.bf16.msra.mxu0 0
      %920 = vmatprep.subr.bf16.mxu0 0
      %921 = vmatpush1.bf16.msra.mxu0 0
      %922 = vmatprep.subr.bf16.mxu0 0
      %923 = vmatpush1.bf16.msra.mxu0 0
      %924 = vmatprep.subr.bf16.mxu0 0
      %925 = vmatpush1.bf16.msra.mxu0 0
      %926 = vmatprep.subr.bf16.mxu0 0
      %927 = vmatpush1.bf16.msra.mxu0 0
      %928 = vmatprep.subr.bf16.mxu0 0
      %929 = vmatpush1.bf16.msra.mxu0 0
      %930 = vmatprep.mubr.bf16.mxu0 0
      %931 = vmatmul.mubr.bf16.gmra.mrb[0].mxu0 %v896
      %v932 = vpop.f32.mrb[0].mxu0
      %v933 = vadd.f32 %v881, %v932
      %v934 = vpop.f32.mrb[0].mxu0
      %v935 = vpop.f32.mrb[0].mxu0
      %v936 = vpop.f32.mrb[0].mxu0
      %937 = vdwg.mxu0
      %s938 = smul.u32 %s93, 8
      %s939 = scalar_lea.vmem [#allocation11], %s938
      %940 = vst [vmem:[%s939] sm:$0xff] %v933
    $region62: #{tpu_custom_call.1} parent=1 // loop_footer
      %s97 = sadd.s32 1, %s93
    $region63: #{tpu_custom_call.1} parent=1 // loop_footer_branch
      %92 = sbr.rel target = $region59
    $region64: #{tpu_custom_call.1} parent=1 // loop_exit
      _
    // Predicated region
    $region73: #{tpu_custom_call.1} parent=1 // pred_check
      _
    $region74: #{tpu_custom_call.1} parent=1 // pred_check_branch
      %942 = sbr.rel (0) target = $region76
    $region75: #{tpu_custom_call.1} parent=1 // pred_region
      %s944 = ssub.s32 640, 640
      %945 = vsyncadd [#allocation7], %s944
      %s946 = sshll.u32 [#allocation11], 4
      %s947 = int_to_ptr.vmem [resolvable:$true] %s946
      %952 = dma.vmem_to_hbm [thread:$0]  %s947, 640, %s12, [#allocation7], 128, 128, 8
    $region76: #{tpu_custom_call.1} parent=1 // pred_fallthru
      _
    // Predicated region
    $region77: #{tpu_custom_call.1} parent=1 // pred_check
      _
    $region78: #{tpu_custom_call.1} parent=1 // pred_check_branch
      %954 = sbr.rel (0) target = $region80
    $region79: #{tpu_custom_call.1} parent=1 // pred_region
      %955 = dma.done [#allocation7], 640
    $region80: #{tpu_custom_call.1} parent=1 // pred_fallthru
      _
    %956 = vsyncpa [#allocation6], 1
    %957 = vsyncpa [#allocation9], 1
    %958 = vsyncpa [#allocation7], 1

</llo_original>
